<compile_context>
chip_gen: v6e
topology: v6e:2x2x1
jax: 0.10.0
libtpu: 0.0.40
codegen_flags: <defaults>
</compile_context>

<pallas_src>
import functools

import jax
import jax.numpy as jnp
from jax.experimental import pallas as pl
from jax.experimental.pallas import tpu as pltpu


_LANES = 128


def _ce_label_smooth_kernel(x_ref, t_ref, out_ref, *, epsilon, num_classes,
                            batch, block_batch):
    i = pl.program_id(0)
    x = x_ref[...].astype(jnp.float32)          # [TB, C]  (cast in-kernel; HBM stream keeps input dtype)
    t = t_ref[...]                              # [TB, 1]  int32 class indices
    tb, c = x.shape

    # Rows past the true batch size (last partial tile): zero them *before* the
    # exp so undefined HBM padding can never produce Inf/NaN.
    row_ids = i * block_batch + jax.lax.broadcasted_iota(jnp.int32, (tb, 1), 0)
    row_valid = row_ids < batch                                         # [TB, 1]
    x = jnp.where(row_valid, x, 0.0)

    # Numerically stable log-softmax pieces (two lane reductions: max, exp-sum).
    m = jnp.max(x, axis=1, keepdims=True)                               # [TB, 1]
    shifted = x - m                                                     # [TB, C]
    lse = jnp.log(jnp.sum(jnp.exp(shifted), axis=1, keepdims=True))     # [TB, 1]

    # Fused label smoothing as a single weighted lane reduction:
    #   w_c    = eps/C + (1-eps) * [c == t_b]       (sum_c w_c == 1)
    #   loss_b = -sum_c w_c * (shifted_bc - lse_b) = lse_b - sum_c w_c * shifted_bc
    cls_idx = jax.lax.broadcasted_iota(jnp.int32, (tb, c), 1)
    base = epsilon / num_classes
    w = jnp.where(cls_idx == t, base + (1.0 - epsilon), base)           # [TB, C]
    weighted = jnp.sum(shifted * w, axis=1, keepdims=True)              # [TB, 1]

    per_row = jnp.where(row_valid, lse - weighted, 0.0)                 # [TB, 1]

    # Per-tile partial sum, broadcast across a lane-dense (1, 128) output block
    # (keeps the store unmasked and the batch grid axis "parallel").
    tile_sum = jnp.sum(per_row, axis=0, keepdims=True)                  # [1, 1]
    out_ref[...] = jnp.broadcast_to(tile_sum, (1, _LANES))


def cross_entropy_label_smooth(inputs, targets, *, num_classes, epsilon,
                               block_batch=None):
    """inputs: [B, C] float, targets: [B] int -> scalar f32 loss."""
    B, C = inputs.shape
    assert C == num_classes
    targets_2d = targets.astype(jnp.int32).reshape(B, 1)

    itemsize = jnp.dtype(inputs.dtype).itemsize
    # Packed-sublane multiple for the *input* dtype (f32:8, bf16:16, i8/fp8:32).
    sublane = {4: 8, 2: 16, 1: 32}.get(itemsize, 8)

    # Generation-aware VMEM budget (v5e/v6e: 128 MiB, v7x: 64 MiB per TC).
    try:
        vmem_cap = int(pltpu.get_tpu_info().vmem_capacity_bytes)
    except Exception:
        vmem_cap = 64 * 1024 * 1024          # conservative fallback (v7x per-TC)
    vmem_budget = min(int(0.70 * vmem_cap), 96 * 1024 * 1024)

    # VMEM bytes live per batch row: double-buffered input block + ~2 f32 [TB, C]
    # intermediates (shifted / weighted product) + the target row.
    bytes_per_row = 2 * C * itemsize + 2 * C * 4 + 2 * 4
    tb_vmem = max(1, vmem_budget // bytes_per_row)

    # HBM-streaming target: ~2 MiB per logits DMA block (>= 1 MiB reaches ~85% of
    # HBM roofline; 128-256 KiB blocks only reach ~30-60%).
    target_block_bytes = 2 * 1024 * 1024
    tb_stream = max(1, target_block_bytes // max(1, C * itemsize))

    tb = min(tb_vmem, max(tb_stream, sublane), B)
    if block_batch is not None:              # explicit override / test hook
        tb = min(tb, int(block_batch), B)

    if tb < B:
        tb = max(sublane, (tb // sublane) * sublane)   # dtype-aware sublane rounding
    else:
        tb = B                                         # single full-batch tile
    num_tiles = pl.cdiv(B, tb)

    # Scoped-VMEM limit derived from the actual tile (not a fixed 32 MiB cap).
    block_bytes = tb * C * itemsize
    vmem_needed = 2 * block_bytes + 3 * tb * C * 4 + (1 << 20)
    vmem_limit = int(min(max(vmem_needed, 32 * 1024 * 1024), vmem_cap))

    kernel = functools.partial(
        _ce_label_smooth_kernel,
        epsilon=float(epsilon),
        num_classes=int(num_classes),
        batch=int(B),
        block_batch=int(tb),
    )

    cost = pl.CostEstimate(
        flops=5 * B * C,
        transcendentals=B * C + B,
        bytes_accessed=B * C * itemsize + B * 4 + num_tiles * _LANES * 4,
    )

    partials = pl.pallas_call(
        kernel,
        out_shape=jax.ShapeDtypeStruct((num_tiles, _LANES), jnp.float32),
        grid=(num_tiles,),
        in_specs=[
            pl.BlockSpec((tb, C), lambda i: (i, 0)),   # logits tile [TB, C]
            pl.BlockSpec((tb, 1), lambda i: (i, 0)),   # targets tile [TB, 1]
        ],
        out_specs=pl.BlockSpec((1, _LANES), lambda i: (i, 0)),  # lane-dense partial
        compiler_params=pltpu.CompilerParams(
            dimension_semantics=("parallel",),          # batch tiles independent
            vmem_limit_bytes=vmem_limit,
        ),
        cost_estimate=cost,
    )(inputs, targets_2d)

    # Tiny epilogue outside the kernel: global sum and divide by the true B.
    return jnp.sum(partials[:, 0]) / jnp.float32(B)


def _reference(inputs, targets, num_classes, epsilon):
    log_probs = jax.nn.log_softmax(inputs.astype(jnp.float32), axis=1)
    one_hot = jax.nn.one_hot(targets, num_classes, dtype=jnp.float32)
    smoothed = (1.0 - epsilon) * one_hot + epsilon / num_classes
    return (-smoothed * log_probs).mean(0).sum()


if __name__ == "__main__":
    num_classes = 128   # lane-dense class dim (multiple of 128)
    epsilon = 0.1

    key = jax.random.PRNGKey(0)
    k1, k2, k3, k4 = jax.random.split(key, 4)

    # Case 1: auto (byte-sized) tiling -> single full-batch tile at this size.
    B1 = 64
    x1 = jax.random.normal(k1, (B1, num_classes), dtype=jnp.float32)
    t1 = jax.random.randint(k2, (B1,), 0, num_classes, dtype=jnp.int32)
    loss1 = cross_entropy_label_smooth(
        x1, t1, num_classes=num_classes, epsilon=epsilon)
    jax.block_until_ready(loss1)
    ref1 = _reference(x1, t1, num_classes, epsilon)
    assert jnp.allclose(loss1, ref1, rtol=1e-5, atol=1e-5), (loss1, ref1)

    # Case 2: forced multi-tile grid (4 tiles of 16 rows), batch divisible.
    loss2 = cross_entropy_label_smooth(
        x1, t1, num_classes=num_classes, epsilon=epsilon, block_batch=16)
    jax.block_until_ready(loss2)
    assert jnp.allclose(loss2, ref1, rtol=1e-5, atol=1e-5), (loss2, ref1)

    # Case 3: batch NOT divisible by the tile (exercises last-tile masking).
    B2 = 50
    x2 = jax.random.normal(k3, (B2, num_classes), dtype=jnp.float32)
    t2 = jax.random.randint(k4, (B2,), 0, num_classes, dtype=jnp.int32)
    loss3 = cross_entropy_label_smooth(
        x2, t2, num_classes=num_classes, epsilon=epsilon, block_batch=16)
    jax.block_until_ready(loss3)
    ref3 = _reference(x2, t2, num_classes, epsilon)
    assert jnp.allclose(loss3, ref3, rtol=1e-5, atol=1e-5), (loss3, ref3)

    print("KERNEL_OK")
</pallas_src>

<mosaic_0001>
module attributes {stable_mosaic.version = 11 : i64} {
  func.func @_ce_label_smooth_kernel(%arg0: i32, %arg1: memref<64x128xf32, #tpu.memory_space<vmem>>, %arg2: memref<64x1xi32, #tpu.memory_space<vmem>>, %arg3: memref<1x128xf32, #tpu.memory_space<vmem>>) attributes {dimension_semantics = [#tpu.dimension_semantics<parallel>], iteration_bounds = array<i64: 1>, scalar_prefetch = 0 : i64, scratch_operands = 0 : i64, tpu.core_type = #tpu.core_type<tc>, window_params = [{transform_indices = @transform_0, window_bounds = array<i64: 64, 128>}, {transform_indices = @transform_1, window_bounds = array<i64: 64, 1>}, {transform_indices = @transform_2, window_bounds = array<i64: 1, 128>}]} {
    %c0 = arith.constant 0 : index
    %c0_0 = arith.constant 0 : index
    %0 = vector.load %arg1[%c0, %c0_0] : memref<64x128xf32, #tpu.memory_space<vmem>>, vector<64x128xf32>
    %c0_1 = arith.constant 0 : index
    %c0_2 = arith.constant 0 : index
    %1 = vector.load %arg2[%c0_1, %c0_2] : memref<64x1xi32, #tpu.memory_space<vmem>>, vector<64x1xi32>
    %c64_i32 = arith.constant 64 : i32
    %2 = arith.muli %arg0, %c64_i32 : i32
    %3 = tpu.iota {dimensions = array<i32: 0>} : vector<64x1xi32>
    %4 = vector.broadcast %2 : i32 to vector<64x1xi32>
    %5 = arith.addi %4, %3 : vector<64x1xi32>
    %c64_i32_3 = arith.constant 64 : i32
    %6 = vector.broadcast %c64_i32_3 : i32 to vector<64x1xi32>
    %7 = arith.cmpi slt, %5, %6 : vector<64x1xi32>
    %cst = arith.constant 0.000000e+00 : f32
    %8 = vector.shape_cast %7 : vector<64x1xi1> to vector<64x1xi1>
    %9 = vector.broadcast %8 : vector<64x1xi1> to vector<64x128xi1>
    %10 = vector.broadcast %cst : f32 to vector<64x128xf32>
    %11 = arith.select %9, %0, %10 : vector<64x128xi1>, vector<64x128xf32>
    %cst_4 = arith.constant dense<0xFF800000> : vector<64xf32>
    %12 = vector.multi_reduction <maximumf>, %11, %cst_4 [1] : vector<64x128xf32> to vector<64xf32>
    %13 = vector.shape_cast %12 : vector<64xf32> to vector<64x1xf32>
    %14 = vector.broadcast %13 : vector<64x1xf32> to vector<64x128xf32>
    %15 = arith.subf %11, %14 : vector<64x128xf32>
    %16 = math.exp %15 : vector<64x128xf32>
    %cst_5 = arith.constant dense<0.000000e+00> : vector<64xf32>
    %17 = vector.multi_reduction <add>, %16, %cst_5 [1] : vector<64x128xf32> to vector<64xf32>
    %18 = vector.shape_cast %17 : vector<64xf32> to vector<64x1xf32>
    %19 = math.log %18 : vector<64x1xf32>
    %20 = tpu.iota {dimensions = array<i32: 1>} : vector<64x128xi32>
    %21 = vector.broadcast %1 : vector<64x1xi32> to vector<64x128xi32>
    %22 = arith.cmpi eq, %20, %21 : vector<64x128xi32>
    %cst_6 = arith.constant 0.900781273 : f32
    %cst_7 = arith.constant 7.812500e-04 : f32
    %23 = vector.broadcast %cst_6 : f32 to vector<64x128xf32>
    %24 = vector.broadcast %cst_7 : f32 to vector<64x128xf32>
    %25 = arith.select %22, %23, %24 : vector<64x128xi1>, vector<64x128xf32>
    %26 = arith.mulf %15, %25 : vector<64x128xf32>
    %cst_8 = arith.constant dense<0.000000e+00> : vector<64xf32>
    %27 = vector.multi_reduction <add>, %26, %cst_8 [1] : vector<64x128xf32> to vector<64xf32>
    %28 = vector.shape_cast %27 : vector<64xf32> to vector<64x1xf32>
    %29 = arith.subf %19, %28 : vector<64x1xf32>
    %cst_9 = arith.constant 0.000000e+00 : f32
    %30 = vector.broadcast %cst_9 : f32 to vector<64x1xf32>
    %31 = arith.select %7, %29, %30 : vector<64x1xi1>, vector<64x1xf32>
    %cst_10 = arith.constant dense<0.000000e+00> : vector<1xf32>
    %32 = vector.multi_reduction <add>, %31, %cst_10 [0] : vector<64x1xf32> to vector<1xf32>
    %33 = vector.shape_cast %32 : vector<1xf32> to vector<1x1xf32>
    %34 = vector.shape_cast %33 : vector<1x1xf32> to vector<1x1xf32>
    %35 = vector.broadcast %34 : vector<1x1xf32> to vector<1x128xf32>
    %c0_11 = arith.constant 0 : index
    %c0_12 = arith.constant 0 : index
    %36 = vector.load %arg3[%c0_11, %c0_12] : memref<1x128xf32, #tpu.memory_space<vmem>>, vector<1x128xf32>
    tpu.vector_store %arg3[%c0_11, %c0_12], %35 {strides = array<i32>} : memref<1x128xf32, #tpu.memory_space<vmem>>, vector<1x128xf32>,
    return
  }
  func.func @transform_0(%arg0: i32) -> (i32, i32) {
    %c0_i32 = arith.constant 0 : i32
    %c0_i32_0 = arith.constant 0 : i32
    return %arg0, %c0_i32 : i32, i32
  }
  func.func @transform_1(%arg0: i32) -> (i32, i32) {
    %c0_i32 = arith.constant 0 : i32
    %c0_i32_0 = arith.constant 0 : i32
    return %arg0, %c0_i32 : i32, i32
  }
  func.func @transform_2(%arg0: i32) -> (i32, i32) {
    %c0_i32 = arith.constant 0 : i32
    %c0_i32_0 = arith.constant 0 : i32
    return %arg0, %c0_i32 : i32, i32
  }
}

</mosaic_0001>

<llo_original>
// kernel: tpu_custom_call.1
$region0: #{tpu_custom_call.1}
  #allocation0 [shape = 'u32[]', space=smem, size = 0x4, offset = 0x4, fixed_abs, tag = 'smem constant byte address 0x4 - core index']
  #allocation1 [shape = 'u32[144,128]{1,0:T(1,128)}', space=vmem, size = 0x12000, scoped, tag = 'internal scratch']
  %s0 = inlined_call_operand.vmem [shape: f32[64,128], index: 0, kind: input, shape index: {}]
  %s1 = inlined_call_operand.vmem [shape: s32[64,1], index: 1, kind: input, shape index: {}]
  %s2 = inlined_call_operand.hbm [shape: f32[1,128], index: 2, kind: output, shape index: {}]
  %s3 = sld [smem:[#allocation0]]
  $region18: #{tpu_custom_call.1} parent=0
    _
  %s5 = ssub.s32 1, %s3
  %s6 = scalar_select 0, %s5, %s3
  $region1: #{tpu_custom_call.1} parent=0
    #allocation2 [shape = 'u8[512]{0}', space=vmem, size = 0x400, scoped, tag = 'output window, operand 0, single buffered']
    #allocation3 [shape = 's32[1]{0}', space=sflag, size = 0x4, scoped, tag = 'scoped memory for tpu_custom_call.1']
    %7 = vsyncpa [#allocation3], 0
    // Predicated region
    $region2: #{tpu_custom_call.1} parent=1 // pred_check
      _
    $region3: #{tpu_custom_call.1} parent=1 // pred_check_branch
      %9 = sbr.rel (0) target = $region5
    $region4: #{tpu_custom_call.1} parent=1 // pred_region
      _
    $region5: #{tpu_custom_call.1} parent=1 // pred_fallthru
      _
    // Predicated region
    $region6: #{tpu_custom_call.1} parent=1 // pred_check
      _
    $region7: #{tpu_custom_call.1} parent=1 // pred_check_branch
      %11 = sbr.rel (0) target = $region9
    $region8: #{tpu_custom_call.1} parent=1 // pred_region
      _
    $region9: #{tpu_custom_call.1} parent=1 // pred_fallthru
      _
    %v12 = vld [vmem:[%s0] sm:$0xff]
    %v13 = vld [vmem:[%s0 + $0x8] sm:$0xff]
    %v14 = vld [vmem:[%s0 + $0x10] sm:$0xff]
    %v15 = vld [vmem:[%s0 + $0x18] sm:$0xff]
    %v16 = vld [vmem:[%s0 + $0x20] sm:$0xff]
    %v17 = vld [vmem:[%s0 + $0x28] sm:$0xff]
    %v18 = vld [vmem:[%s0 + $0x30] sm:$0xff]
    %v19 = vld [vmem:[%s0 + $0x38] sm:$0xff]
    %v20 = vld [vmem:[%s1] sm:$0xff]
    %v21 = vld [vmem:[%s1 + $0x8] sm:$0xff]
    %v22 = vld [vmem:[%s1 + $0x10] sm:$0xff]
    %v23 = vld [vmem:[%s1 + $0x18] sm:$0xff]
    %v24 = vld [vmem:[%s1 + $0x20] sm:$0xff]
    %v25 = vld [vmem:[%s1 + $0x28] sm:$0xff]
    %v26 = vld [vmem:[%s1 + $0x30] sm:$0xff]
    %v27 = vld [vmem:[%s1 + $0x38] sm:$0xff]
    %s28 = smul.u32 0, 64
    %v29 = vlaneseq
    %v30 = vshrl.u32 %v29, 7
    %v31 = vadd.s32 %v30, 8
    %v32 = vadd.s32 %v30, 16
    %v33 = vadd.s32 %v30, 24
    %v34 = vadd.s32 %v30, 32
    %v35 = vadd.s32 %v30, 40
    %v36 = vadd.s32 %v30, 48
    %v37 = vadd.s32 %v30, 56
    %v38 = vstv %s28
    %v39 = vadd.s32 %v38, %v30
    %v40 = vadd.s32 %v38, %v31
    %v41 = vadd.s32 %v38, %v32
    %v42 = vadd.s32 %v38, %v33
    %v43 = vadd.s32 %v38, %v34
    %v44 = vadd.s32 %v38, %v35
    %v45 = vadd.s32 %v38, %v36
    %v46 = vadd.s32 %v38, %v37
    %vm47 = vcmp.lt.s32.totalorder %v39, 64
    %vm48 = vcmp.lt.s32.totalorder %v40, 64
    %vm49 = vcmp.lt.s32.totalorder %v41, 64
    %vm50 = vcmp.lt.s32.totalorder %v42, 64
    %vm51 = vcmp.lt.s32.totalorder %v43, 64
    %vm52 = vcmp.lt.s32.totalorder %v44, 64
    %vm53 = vcmp.lt.s32.totalorder %v45, 64
    %vm54 = vcmp.lt.s32.totalorder %v46, 64
    %v55 = vsel %vm47, 1, 0
    %v56 = vsel %vm48, 1, 0
    %v57 = vsel %vm49, 1, 0
    %v58 = vsel %vm50, 1, 0
    %v59 = vsel %vm51, 1, 0
    %v60 = vsel %vm52, 1, 0
    %v61 = vsel %vm53, 1, 0
    %v62 = vsel %vm54, 1, 0
    %vm63 = vcmp.eq.s32.totalorder %v55, 1
    %vm64 = vcmp.eq.s32.totalorder %v56, 1
    %vm65 = vcmp.eq.s32.totalorder %v57, 1
    %vm66 = vcmp.eq.s32.totalorder %v58, 1
    %vm67 = vcmp.eq.s32.totalorder %v59, 1
    %vm68 = vcmp.eq.s32.totalorder %v60, 1
    %vm69 = vcmp.eq.s32.totalorder %v61, 1
    %vm70 = vcmp.eq.s32.totalorder %v62, 1
    %v71 = vsel %vm63, %v12, 0.0
    %v72 = vsel %vm64, %v13, 0.0
    %v73 = vsel %vm65, %v14, 0.0
    %v74 = vsel %vm66, %v15, 0.0
    %v75 = vsel %vm67, %v16, 0.0
    %v76 = vsel %vm68, %v17, 0.0
    %v77 = vsel %vm69, %v18, 0.0
    %v78 = vsel %vm70, %v19, 0.0
    %79 = vmax.xlane.f32.xlu0 %v71
    %v80 = vpop.xlane.xlu0 %79
    %81 = vmax.xlane.f32.xlu0 %v72
    %v82 = vpop.xlane.xlu0 %81
    %83 = vmax.xlane.f32.xlu0 %v73
    %v84 = vpop.xlane.xlu0 %83
    %85 = vmax.xlane.f32.xlu0 %v74
    %v86 = vpop.xlane.xlu0 %85
    %87 = vmax.xlane.f32.xlu0 %v75
    %v88 = vpop.xlane.xlu0 %87
    %89 = vmax.xlane.f32.xlu0 %v76
    %v90 = vpop.xlane.xlu0 %89
    %91 = vmax.xlane.f32.xlu0 %v77
    %v92 = vpop.xlane.xlu0 %91
    %93 = vmax.xlane.f32.xlu0 %v78
    %v94 = vpop.xlane.xlu0 %93
    %v95 = vsub.f32 %v71, %v80
    %v96 = vsub.f32 %v72, %v82
    %v97 = vsub.f32 %v73, %v84
    %v98 = vsub.f32 %v74, %v86
    %v99 = vsub.f32 %v75, %v88
    %v100 = vsub.f32 %v76, %v90
    %v101 = vsub.f32 %v77, %v92
    %v102 = vsub.f32 %v78, %v94
    %v103 = vmul.f32 %v95, 1.442695
    %v104 = vpow.pop %v103
    %v105 = vmul.f32 %v96, 1.442695
    %v106 = vpow.pop %v105
    %v107 = vmul.f32 %v97, 1.442695
    %v108 = vpow.pop %v107
    %v109 = vmul.f32 %v98, 1.442695
    %v110 = vpow.pop %v109
    %v111 = vmul.f32 %v99, 1.442695
    %v112 = vpow.pop %v111
    %v113 = vmul.f32 %v100, 1.442695
    %v114 = vpow.pop %v113
    %v115 = vmul.f32 %v101, 1.442695
    %v116 = vpow.pop %v115
    %v117 = vmul.f32 %v102, 1.442695
    %v118 = vpow.pop %v117
    %119 = vadd.xlane.f32.xlu0 %v104
    %v120 = vpop.xlane.xlu0 %119
    %121 = vadd.xlane.f32.xlu0 %v106
    %v122 = vpop.xlane.xlu0 %121
    %123 = vadd.xlane.f32.xlu0 %v108
    %v124 = vpop.xlane.xlu0 %123
    %125 = vadd.xlane.f32.xlu0 %v110
    %v126 = vpop.xlane.xlu0 %125
    %127 = vadd.xlane.f32.xlu0 %v112
    %v128 = vpop.xlane.xlu0 %127
    %129 = vadd.xlane.f32.xlu0 %v114
    %v130 = vpop.xlane.xlu0 %129
    %131 = vadd.xlane.f32.xlu0 %v116
    %v132 = vpop.xlane.xlu0 %131
    %133 = vadd.xlane.f32.xlu0 %v118
    %v134 = vpop.xlane.xlu0 %133
    %v135 = vlog2.pop %v120
    %v136 = vmul.f32 %v135, 0.6931472
    %v137 = vlog2.pop %v122
    %v138 = vmul.f32 %v137, 0.6931472
    %v139 = vlog2.pop %v124
    %v140 = vmul.f32 %v139, 0.6931472
    %v141 = vlog2.pop %v126
    %v142 = vmul.f32 %v141, 0.6931472
    %v143 = vlog2.pop %v128
    %v144 = vmul.f32 %v143, 0.6931472
    %v145 = vlog2.pop %v130
    %v146 = vmul.f32 %v145, 0.6931472
    %v147 = vlog2.pop %v132
    %v148 = vmul.f32 %v147, 0.6931472
    %v149 = vlog2.pop %v134
    %v150 = vmul.f32 %v149, 0.6931472
    %v151 = vlaneseq
    %v152 = vand.u32 %v151, 127
    %153 = vset.pattern.permute.xlu0 0
    %154 = vperm.xlu0 %153, %v20
    %v155 = vpop.permute.xlu0 %154
    %156 = vset.pattern.permute.xlu0 0
    %157 = vperm.xlu0 %156, %v21
    %v158 = vpop.permute.xlu0 %157
    %159 = vset.pattern.permute.xlu0 0
    %160 = vperm.xlu0 %159, %v22
    %v161 = vpop.permute.xlu0 %160
    %162 = vset.pattern.permute.xlu0 0
    %163 = vperm.xlu0 %162, %v23
    %v164 = vpop.permute.xlu0 %163
    %165 = vset.pattern.permute.xlu0 0
    %166 = vperm.xlu0 %165, %v24
    %v167 = vpop.permute.xlu0 %166
    %168 = vset.pattern.permute.xlu0 0
    %169 = vperm.xlu0 %168, %v25
    %v170 = vpop.permute.xlu0 %169
    %171 = vset.pattern.permute.xlu0 0
    %172 = vperm.xlu0 %171, %v26
    %v173 = vpop.permute.xlu0 %172
    %174 = vset.pattern.permute.xlu0 0
    %175 = vperm.xlu0 %174, %v27
    %v176 = vpop.permute.xlu0 %175
    %vm177 = vcmp.eq.s32.totalorder %v152, %v155
    %vm178 = vcmp.eq.s32.totalorder %v152, %v158
    %vm179 = vcmp.eq.s32.totalorder %v152, %v161
    %vm180 = vcmp.eq.s32.totalorder %v152, %v164
    %vm181 = vcmp.eq.s32.totalorder %v152, %v167
    %vm182 = vcmp.eq.s32.totalorder %v152, %v170
    %vm183 = vcmp.eq.s32.totalorder %v152, %v173
    %vm184 = vcmp.eq.s32.totalorder %v152, %v176
    %v185 = vsel %vm177, 0.9007813, 0.00078125
    %v186 = vsel %vm178, 0.9007813, 0.00078125
    %v187 = vsel %vm179, 0.9007813, 0.00078125
    %v188 = vsel %vm180, 0.9007813, 0.00078125
    %v189 = vsel %vm181, 0.9007813, 0.00078125
    %v190 = vsel %vm182, 0.9007813, 0.00078125
    %v191 = vsel %vm183, 0.9007813, 0.00078125
    %v192 = vsel %vm184, 0.9007813, 0.00078125
    %v193 = vmul.f32 %v95, %v185
    %v194 = vmul.f32 %v96, %v186
    %v195 = vmul.f32 %v97, %v187
    %v196 = vmul.f32 %v98, %v188
    %v197 = vmul.f32 %v99, %v189
    %v198 = vmul.f32 %v100, %v190
    %v199 = vmul.f32 %v101, %v191
    %v200 = vmul.f32 %v102, %v192
    %201 = vadd.xlane.f32.xlu0 %v193
    %v202 = vpop.xlane.xlu0 %201
    %203 = vadd.xlane.f32.xlu0 %v194
    %v204 = vpop.xlane.xlu0 %203
    %205 = vadd.xlane.f32.xlu0 %v195
    %v206 = vpop.xlane.xlu0 %205
    %207 = vadd.xlane.f32.xlu0 %v196
    %v208 = vpop.xlane.xlu0 %207
    %209 = vadd.xlane.f32.xlu0 %v197
    %v210 = vpop.xlane.xlu0 %209
    %211 = vadd.xlane.f32.xlu0 %v198
    %v212 = vpop.xlane.xlu0 %211
    %213 = vadd.xlane.f32.xlu0 %v199
    %v214 = vpop.xlane.xlu0 %213
    %215 = vadd.xlane.f32.xlu0 %v200
    %v216 = vpop.xlane.xlu0 %215
    %v217 = vsub.f32 %v136, %v202
    %v218 = vsub.f32 %v138, %v204
    %v219 = vsub.f32 %v140, %v206
    %v220 = vsub.f32 %v142, %v208
    %v221 = vsub.f32 %v144, %v210
    %v222 = vsub.f32 %v146, %v212
    %v223 = vsub.f32 %v148, %v214
    %v224 = vsub.f32 %v150, %v216
    %v225 = vsel %vm47, %v217, 0.0
    %v226 = vsel %vm48, %v218, 0.0
    %v227 = vsel %vm49, %v219, 0.0
    %v228 = vsel %vm50, %v220, 0.0
    %v229 = vsel %vm51, %v221, 0.0
    %v230 = vsel %vm52, %v222, 0.0
    %v231 = vsel %vm53, %v223, 0.0
    %v232 = vsel %vm54, %v224, 0.0
    %v233 = vadd.f32 %v225, %v226
    %v234 = vadd.f32 %v233, %v227
    %v235 = vadd.f32 %v234, %v228
    %v236 = vadd.f32 %v235, %v229
    %v237 = vadd.f32 %v236, %v230
    %v238 = vadd.f32 %v237, %v231
    %v239 = vadd.f32 %v238, %v232
    %v240 = vrot.slane %v239, 4
    %v241 = vadd.f32 %v239, %v240
    %v242 = vrot.slane %v241, 2
    %v243 = vadd.f32 %v241, %v242
    %v244 = vrot.slane %v243, 1
    %v245 = vadd.f32 %v243, %v244
    %246 = vst [vmem:[#allocation2] sm:$0x1] %v245
    // Predicated region
    $region10: #{tpu_custom_call.1} parent=1 // pred_check
      _
    $region11: #{tpu_custom_call.1} parent=1 // pred_check_branch
      %248 = sbr.rel (0) target = $region13
    $region12: #{tpu_custom_call.1} parent=1 // pred_region
      %s250 = ssub.s32 16, 16
      %251 = vsyncadd [#allocation3], %s250
      %s253 = sshll.u32 [#allocation2], 4
      %s254 = int_to_ptr.vmem [resolvable:$true] %s253
      %256 = dma.vmem_to_hbm [thread:$0]  %s254, 16, %s2, [#allocation3]
    $region13: #{tpu_custom_call.1} parent=1 // pred_fallthru
      _
    // Predicated region
    $region14: #{tpu_custom_call.1} parent=1 // pred_check
      _
    $region15: #{tpu_custom_call.1} parent=1 // pred_check_branch
      %258 = sbr.rel (0) target = $region17
    $region16: #{tpu_custom_call.1} parent=1 // pred_region
      %259 = dma.done [#allocation3], 16
    $region17: #{tpu_custom_call.1} parent=1 // pred_fallthru
      _
    %260 = vsyncpa [#allocation3], 1

</llo_original>
